<compile_context>
chip_gen: v6e
topology: v6e:2x2x1
jax: 0.10.0
libtpu: 0.0.40
codegen_flags: <defaults>
</compile_context>

<pallas_src>
import math
from functools import partial

import jax
import jax.numpy as jnp
from jax.experimental import pallas as pl
from jax.experimental.pallas import tpu as pltpu

CURRENT_INDEX = 12  # hard-coded in the PyTorch module (slices :12 / 13: and [:, 0, 12])


def _round_up(x, m):
    return ((x + m - 1) // m) * m


def _aggregator_kernel(cs_ref, sf_ref, ct_ref, tf_ref, dist_ref,
                       wcat_ref, bcat_ref, o_ref, *, scale, d):
    # cs   (TB, D)      current_static_feature
    # sf   (TB, P, D)   static_features
    # ct   (TB, F)      current_time_feature flattened (lane-dense)
    # tf   (TB, P, F)   time_features flattened
    # dist (TB, P)      distances
    # wcat (D, D+1)     [Wq^T @ Wk | Wq^T @ bk]   (resident across grid steps)
    # bcat (1, D+1)     [bq @ Wk   | bq . bk]     (resident across grid steps)
    # o    (TB, F)
    cs = cs_ref[...]
    p = sf_ref.shape[1]

    # Fused query/key projection (exact rewrite of q . (sf @ Wk^T + bk)):
    #   [qk | qb] = cs @ [Wq^T Wk | Wq^T bk] + [bq Wk | bq.bk]
    qkqb = jnp.dot(cs, wcat_ref[...], preferred_element_type=jnp.float32) + bcat_ref[...]
    qk = qkqb[:, :d]                                                       # (TB, D)
    qb = qkqb[:, d:d + 1]                                                  # (TB, 1)

    # scores[b, p] = (qk[b] . sf[b, p] + qb[b]) / sqrt(D)
    # VPU broadcast-mul + lane reduce over D (avoids TB padded M=1 MXU matmuls).
    scores = (jnp.sum(qk[:, None, :] * sf_ref[...], axis=-1) + qb) * scale  # (TB, P)

    # Distance-adjusted softmax over positions; reciprocals go to the EUP slot.
    adj = scores * pl.reciprocal(dist_ref[...] + 1e-9)
    m = jnp.max(adj, axis=-1, keepdims=True)
    e = jnp.exp(adj - m)
    w = e * pl.reciprocal(jnp.sum(e, axis=-1, keepdims=True))               # (TB, P)

    # Split the hard-coded "current" position (index 12) from the neighbours:
    # static lane slice for w_cur, single iota+where for the neighbour mask.
    w_cur = w[:, CURRENT_INDEX:CURRENT_INDEX + 1]                           # (TB, 1)
    pos = jax.lax.broadcasted_iota(jnp.int32, (1, p), 1)
    w_nb = jnp.where(pos == CURRENT_INDEX, 0.0, w)                          # (TB, P)

    # aggregated = sum_{p != 12} w[p] * tf[p] + w[12] * current_time
    # VPU multiply + sublane reduce over P (no padded (1,P)x(P,F) MXU matmuls);
    # trivially hidden under the dominant tf HBM stream.
    tf = tf_ref[...].astype(jnp.float32)                                    # (TB, P, F)
    agg = jnp.sum(w_nb[:, :, None] * tf, axis=1)                            # (TB, F)
    ct = ct_ref[...].astype(jnp.float32)
    o_ref[...] = (agg + w_cur * ct).astype(o_ref.dtype)


def _choose_batch_tile(b, p, d, f, itemsize=4, vmem_budget=24 << 20, min_tiles=2):
    """Batch tile: as large as the (double-buffered) VMEM budget allows, a
    multiple of 8 (sublane), and small enough that the grid has >= min_tiles
    steps so the 'parallel' batch axis can be split across TensorCores (v7x)."""
    if b <= 8:
        return b                                   # one tiny tile == full array
    per_row = (p * d + d + p) * 4 + (p + 2) * f * itemsize   # streamed bytes / row
    budget_rows = max(8, ((vmem_budget // (2 * per_row)) // 8) * 8)
    megacore_rows = _round_up(-(-b // min_tiles), 8)
    return max(8, min(budget_rows, megacore_rows))


def batch_distance_aware_attention_aggregator(
        current_static_feature,   # (B, D)
        static_features,          # (B, P, D)
        current_time_feature,     # (B, K, L)
        time_features,            # (B, P, K, L)
        distances,                # (B, P)
        wq, bq, wk, bk,           # nn.Linear params, PyTorch layout: W (out,in), b (out,)
        stream_dtype=None):       # e.g. jnp.bfloat16 to halve tf/ct HBM traffic
    B, P, D = static_features.shape
    _, _, K, L = time_features.shape
    F = K * L
    assert current_static_feature.shape == (B, D)
    assert current_time_feature.shape == (B, K, L)
    assert distances.shape == (B, P)
    assert P > CURRENT_INDEX, "module hard-codes position index 12 as 'current'"

    out_dtype = current_time_feature.dtype

    # Pure layout plumbing: lane-dense last dim F = K*L (free reshapes).
    ct_flat = current_time_feature.reshape(B, F)
    tf_flat = time_features.reshape(B, P, F)
    if stream_dtype is not None:
        ct_flat = ct_flat.astype(stream_dtype)
        tf_flat = tf_flat.astype(stream_dtype)
    itemsize = jnp.dtype(tf_flat.dtype).itemsize

    # Fold both DxD projections into one tiny precomputed matrix (exact rewrite):
    #   qk = cs @ (Wq^T Wk) + bq Wk ,   qb = cs @ (Wq^T bk) + bq . bk
    f32 = jnp.float32
    wq_t = wq.T.astype(f32)
    w_cat = jnp.concatenate(
        [wq_t @ wk.astype(f32), (wq_t @ bk.astype(f32))[:, None]], axis=1)      # (D, D+1)
    b_cat = jnp.concatenate(
        [bq.astype(f32) @ wk.astype(f32), (bq.astype(f32) @ bk.astype(f32))[None]]
    )[None, :]                                                                   # (1, D+1)

    # Generation-aware VMEM sizing (64 MiB/TC on v7x, 128 MiB on v5e/v6e).
    try:
        vmem_cap = int(getattr(pltpu.get_tpu_info(), "vmem_capacity_bytes", 64 << 20))
    except Exception:
        vmem_cap = 64 << 20
    tile_budget = min(vmem_cap // 4, 24 << 20)
    vmem_limit = int(min(vmem_cap * 3 // 4, 96 << 20))

    # Lane-dense tf loads / output stores: pad F to a multiple of 128 if needed.
    F_pad = F if F % 128 == 0 else _round_up(F, 128)

    tb = _choose_batch_tile(B, P, D, F_pad, itemsize=itemsize, vmem_budget=tile_budget)
    num_tiles = pl.cdiv(B, tb)
    B_pad = num_tiles * tb

    pad_b, pad_f = B_pad - B, F_pad - F
    cs_in, sf_in, dist_in = current_static_feature, static_features, distances
    ct_in, tf_in = ct_flat, tf_flat
    if pad_b or pad_f:
        cs_in = jnp.pad(cs_in, ((0, pad_b), (0, 0)))
        sf_in = jnp.pad(sf_in, ((0, pad_b), (0, 0), (0, 0)))
        dist_in = jnp.pad(dist_in, ((0, pad_b), (0, 0)))
        ct_in = jnp.pad(ct_in, ((0, pad_b), (0, pad_f)))
        tf_in = jnp.pad(tf_in, ((0, pad_b), (0, 0), (0, pad_f)))

    scale = 1.0 / math.sqrt(D)
    out_itemsize = jnp.dtype(out_dtype).itemsize

    cost = pl.CostEstimate(
        flops=2 * B_pad * (D * (D + 1) + P * D + P * F_pad),
        transcendentals=B_pad * P,
        bytes_accessed=(itemsize * B_pad * (P * F_pad + F_pad)       # tf + ct streams
                        + 4 * B_pad * (D + P * D + P)                # cs + sf + dist
                        + 4 * (D * (D + 1) + (D + 1))                # resident weights
                        + out_itemsize * B_pad * F_pad),             # output
    )

    out_flat = pl.pallas_call(
        partial(_aggregator_kernel, scale=scale, d=D),
        out_shape=jax.ShapeDtypeStruct((B_pad, F_pad), out_dtype),
        grid_spec=pltpu.PrefetchScalarGridSpec(
            num_scalar_prefetch=0,
            grid=(num_tiles,),
            in_specs=[
                pl.BlockSpec((tb, D), lambda i: (i, 0)),            # current_static
                pl.BlockSpec((tb, P, D), lambda i: (i, 0, 0)),      # static_features
                pl.BlockSpec((tb, F_pad), lambda i: (i, 0)),        # current_time (flat)
                pl.BlockSpec((tb, P, F_pad), lambda i: (i, 0, 0)),  # time_features (flat)
                pl.BlockSpec((tb, P), lambda i: (i, 0)),            # distances
                pl.BlockSpec((D, D + 1), lambda i: (0, 0)),         # fused weights (resident)
                pl.BlockSpec((1, D + 1), lambda i: (0, 0)),         # fused bias    (resident)
            ],
            out_specs=pl.BlockSpec((tb, F_pad), lambda i: (i, 0)),
        ),
        compiler_params=pltpu.CompilerParams(
            dimension_semantics=("parallel",),
            vmem_limit_bytes=vmem_limit,
        ),
        cost_estimate=cost,
    )(cs_in, sf_in, ct_in, tf_in, dist_in, w_cat, b_cat)

    out = out_flat[:B, :F] if (pad_b or pad_f) else out_flat
    return out.reshape(B, K, L)


if __name__ == "__main__":
    # Small shapes implied by the forward: P must exceed the hard-coded index 12.
    B, P, D = 2, 16, 32        # batch, num_positions, static_dim
    K, L = 8, 32               # per-position time-feature map (F = 256, lane-dense)

    key = jax.random.PRNGKey(0)
    ks = jax.random.split(key, 9)
    cs = jax.random.normal(ks[0], (B, D), dtype=jnp.float32)
    sf = jax.random.normal(ks[1], (B, P, D), dtype=jnp.float32)
    ct = jax.random.normal(ks[2], (B, K, L), dtype=jnp.float32)
    tf = jax.random.normal(ks[3], (B, P, K, L), dtype=jnp.float32)
    dist = jax.random.uniform(ks[4], (B, P), jnp.float32, 0.2, 3.0)

    bound = 1.0 / math.sqrt(D)   # nn.Linear-style deterministic init
    wq = jax.random.uniform(ks[5], (D, D), jnp.float32, -bound, bound)
    bq = jax.random.uniform(ks[6], (D,), jnp.float32, -bound, bound)
    wk = jax.random.uniform(ks[7], (D, D), jnp.float32, -bound, bound)
    bk = jax.random.uniform(ks[8], (D,), jnp.float32, -bound, bound)

    out = batch_distance_aware_attention_aggregator(cs, sf, ct, tf, dist, wq, bq, wk, bk)
    out = jax.block_until_ready(out)

    # Pure-JAX reference mirroring the PyTorch forward verbatim (show=False path).
    def reference(cs, sf, ct, tf, dist):
        q = cs @ wq.T + bq                                        # (B, D)
        k = jnp.einsum('bpd,ed->bpe', sf, wk) + bk                # (B, P, D)
        scores = jnp.einsum('bd,bpd->bp', q, k) / math.sqrt(D)
        adj = scores * (1.0 / (dist + 1e-9))
        w = jax.nn.softmax(adj, axis=-1)                          # (B, P)
        nb_w = jnp.concatenate([w[:, :CURRENT_INDEX], w[:, CURRENT_INDEX + 1:]], axis=1)
        nb_t = jnp.concatenate([tf[:, :CURRENT_INDEX], tf[:, CURRENT_INDEX + 1:]], axis=1)
        weighted = jnp.einsum('bj,bjkl->bkl', nb_w, nb_t)
        return ct * w[:, CURRENT_INDEX][:, None, None] + weighted

    ref = reference(cs, sf, ct, tf, dist)
    assert out.shape == (B, K, L)
    err = jnp.max(jnp.abs(out - ref))
    assert jnp.allclose(out, ref, atol=1e-4, rtol=1e-4), f"mismatch vs reference (max abs diff {err})"
    print("KERNEL_OK")
</pallas_src>

<mosaic_0001>
module attributes {stable_mosaic.version = 11 : i64} {
  func.func @_aggregator_kernel(%arg0: i32, %arg1: memref<2x32xf32, #tpu.memory_space<vmem>>, %arg2: memref<2x16x32xf32, #tpu.memory_space<vmem>>, %arg3: memref<2x256xf32, #tpu.memory_space<vmem>>, %arg4: memref<2x16x256xf32, #tpu.memory_space<vmem>>, %arg5: memref<2x16xf32, #tpu.memory_space<vmem>>, %arg6: memref<32x33xf32, #tpu.memory_space<vmem>>, %arg7: memref<1x33xf32, #tpu.memory_space<vmem>>, %arg8: memref<2x256xf32, #tpu.memory_space<vmem>>) attributes {dimension_semantics = [#tpu.dimension_semantics<parallel>], iteration_bounds = array<i64: 1>, scalar_prefetch = 0 : i64, scratch_operands = 0 : i64, tpu.core_type = #tpu.core_type<tc>, window_params = [{transform_indices = @transform_0, window_bounds = array<i64: 2, 32>}, {transform_indices = @transform_1, window_bounds = array<i64: 2, 16, 32>}, {transform_indices = @transform_2, window_bounds = array<i64: 2, 256>}, {transform_indices = @transform_3, window_bounds = array<i64: 2, 16, 256>}, {transform_indices = @transform_4, window_bounds = array<i64: 2, 16>}, {pipeline_mode = #tpu.pipeline_mode<synchronous>, transform_indices = @transform_5, window_bounds = array<i64: 32, 33>}, {pipeline_mode = #tpu.pipeline_mode<synchronous>, transform_indices = @transform_6, window_bounds = array<i64: 1, 33>}, {transform_indices = @transform_7, window_bounds = array<i64: 2, 256>}]} {
    %c0 = arith.constant 0 : index
    %c0_0 = arith.constant 0 : index
    %0 = vector.load %arg1[%c0, %c0_0] : memref<2x32xf32, #tpu.memory_space<vmem>>, vector<2x32xf32>
    %c0_1 = arith.constant 0 : index
    %c0_2 = arith.constant 0 : index
    %1 = vector.load %arg6[%c0_1, %c0_2] : memref<32x33xf32, #tpu.memory_space<vmem>>, vector<32x33xf32>
    %cst = arith.constant dense<0.000000e+00> : vector<2x33xf32>
    %2 = tpu.matmul %0, %1, %cst {dimension_numbers = #tpu.dot_dimension_numbers<[1], [0], [0], [1], [0, 0, 1, 1], [], []>} : vector<2x32xf32>, vector<32x33xf32>, vector<2x33xf32> -> vector<2x33xf32>
    %c0_3 = arith.constant 0 : index
    %c0_4 = arith.constant 0 : index
    %3 = vector.load %arg7[%c0_3, %c0_4] : memref<1x33xf32, #tpu.memory_space<vmem>>, vector<1x33xf32>
    %4 = vector.broadcast %3 : vector<1x33xf32> to vector<2x33xf32>
    %5 = arith.addf %2, %4 : vector<2x33xf32>
    %6 = vector.extract_strided_slice %5 {offsets = [0, 0], sizes = [2, 32], strides = [1, 1]} : vector<2x33xf32> to vector<2x32xf32>
    %7 = vector.extract_strided_slice %5 {offsets = [0, 32], sizes = [2, 1], strides = [1, 1]} : vector<2x33xf32> to vector<2x1xf32>
    %8 = vector.shape_cast %6 : vector<2x32xf32> to vector<2x1x32xf32>
    %c0_5 = arith.constant 0 : index
    %c0_6 = arith.constant 0 : index
    %c0_7 = arith.constant 0 : index
    %9 = vector.load %arg2[%c0_5, %c0_6, %c0_7] : memref<2x16x32xf32, #tpu.memory_space<vmem>>, vector<2x16x32xf32>
    %10 = vector.broadcast %8 : vector<2x1x32xf32> to vector<2x16x32xf32>
    %11 = arith.mulf %10, %9 : vector<2x16x32xf32>
    %cst_8 = arith.constant dense<0.000000e+00> : vector<2x16xf32>
    %12 = vector.multi_reduction <add>, %11, %cst_8 [2] : vector<2x16x32xf32> to vector<2x16xf32>
    %13 = vector.broadcast %7 : vector<2x1xf32> to vector<2x16xf32>
    %14 = arith.addf %12, %13 : vector<2x16xf32>
    %cst_9 = arith.constant 0.176776692 : f32
    %15 = vector.broadcast %cst_9 : f32 to vector<2x16xf32>
    %16 = arith.mulf %14, %15 : vector<2x16xf32>
    %c0_10 = arith.constant 0 : index
    %c0_11 = arith.constant 0 : index
    %17 = vector.load %arg5[%c0_10, %c0_11] : memref<2x16xf32, #tpu.memory_space<vmem>>, vector<2x16xf32>
    %cst_12 = arith.constant 9.99999971E-10 : f32
    %18 = vector.broadcast %cst_12 : f32 to vector<2x16xf32>
    %19 = arith.addf %17, %18 : vector<2x16xf32>
    %20 = tpu.reciprocal %19 : vector<2x16xf32> -> vector<2x16xf32>
    %21 = arith.mulf %16, %20 : vector<2x16xf32>
    %cst_13 = arith.constant dense<0xFF800000> : vector<2xf32>
    %22 = vector.multi_reduction <maximumf>, %21, %cst_13 [1] : vector<2x16xf32> to vector<2xf32>
    %23 = vector.shape_cast %22 : vector<2xf32> to vector<2x1xf32>
    %24 = vector.broadcast %23 : vector<2x1xf32> to vector<2x16xf32>
    %25 = arith.subf %21, %24 : vector<2x16xf32>
    %26 = math.exp %25 : vector<2x16xf32>
    %cst_14 = arith.constant dense<0.000000e+00> : vector<2xf32>
    %27 = vector.multi_reduction <add>, %26, %cst_14 [1] : vector<2x16xf32> to vector<2xf32>
    %28 = vector.shape_cast %27 : vector<2xf32> to vector<2x1xf32>
    %29 = tpu.reciprocal %28 : vector<2x1xf32> -> vector<2x1xf32>
    %30 = vector.broadcast %29 : vector<2x1xf32> to vector<2x16xf32>
    %31 = arith.mulf %26, %30 : vector<2x16xf32>
    %32 = vector.extract_strided_slice %31 {offsets = [0, 12], sizes = [2, 1], strides = [1, 1]} : vector<2x16xf32> to vector<2x1xf32>
    %33 = tpu.iota {dimensions = array<i32: 1>} : vector<1x16xi32>
    %c12_i32 = arith.constant 12 : i32
    %34 = vector.broadcast %c12_i32 : i32 to vector<1x16xi32>
    %35 = arith.cmpi eq, %33, %34 : vector<1x16xi32>
    %cst_15 = arith.constant 0.000000e+00 : f32
    %36 = vector.shape_cast %35 : vector<1x16xi1> to vector<1x16xi1>
    %37 = vector.broadcast %36 : vector<1x16xi1> to vector<2x16xi1>
    %38 = vector.broadcast %cst_15 : f32 to vector<2x16xf32>
    %39 = arith.select %37, %38, %31 : vector<2x16xi1>, vector<2x16xf32>
    %c0_16 = arith.constant 0 : index
    %c0_17 = arith.constant 0 : index
    %c0_18 = arith.constant 0 : index
    %40 = vector.load %arg4[%c0_16, %c0_17, %c0_18] : memref<2x16x256xf32, #tpu.memory_space<vmem>>, vector<2x16x256xf32>
    %41 = vector.shape_cast %39 : vector<2x16xf32> to vector<2x16x1xf32>
    %42 = vector.broadcast %41 : vector<2x16x1xf32> to vector<2x16x256xf32>
    %43 = arith.mulf %42, %40 : vector<2x16x256xf32>
    %cst_19 = arith.constant dense<0.000000e+00> : vector<2x256xf32>
    %44 = vector.multi_reduction <add>, %43, %cst_19 [1] : vector<2x16x256xf32> to vector<2x256xf32>
    %c0_20 = arith.constant 0 : index
    %c0_21 = arith.constant 0 : index
    %45 = vector.load %arg3[%c0_20, %c0_21] : memref<2x256xf32, #tpu.memory_space<vmem>>, vector<2x256xf32>
    %46 = vector.broadcast %32 : vector<2x1xf32> to vector<2x256xf32>
    %47 = arith.mulf %46, %45 : vector<2x256xf32>
    %48 = arith.addf %44, %47 : vector<2x256xf32>
    %c0_22 = arith.constant 0 : index
    %c0_23 = arith.constant 0 : index
    %49 = vector.load %arg8[%c0_22, %c0_23] : memref<2x256xf32, #tpu.memory_space<vmem>>, vector<2x256xf32>
    tpu.vector_store %arg8[%c0_22, %c0_23], %48 {strides = array<i32>} : memref<2x256xf32, #tpu.memory_space<vmem>>, vector<2x256xf32>,
    return
  }
  func.func @transform_0(%arg0: i32) -> (i32, i32) {
    %c0_i32 = arith.constant 0 : i32
    %c0_i32_0 = arith.constant 0 : i32
    return %arg0, %c0_i32 : i32, i32
  }
  func.func @transform_1(%arg0: i32) -> (i32, i32, i32) {
    %c0_i32 = arith.constant 0 : i32
    %c0_i32_0 = arith.constant 0 : i32
    %c0_i32_1 = arith.constant 0 : i32
    return %arg0, %c0_i32, %c0_i32_0 : i32, i32, i32
  }
  func.func @transform_2(%arg0: i32) -> (i32, i32) {
    %c0_i32 = arith.constant 0 : i32
    %c0_i32_0 = arith.constant 0 : i32
    return %arg0, %c0_i32 : i32, i32
  }
  func.func @transform_3(%arg0: i32) -> (i32, i32, i32) {
    %c0_i32 = arith.constant 0 : i32
    %c0_i32_0 = arith.constant 0 : i32
    %c0_i32_1 = arith.constant 0 : i32
    return %arg0, %c0_i32, %c0_i32_0 : i32, i32, i32
  }
  func.func @transform_4(%arg0: i32) -> (i32, i32) {
    %c0_i32 = arith.constant 0 : i32
    %c0_i32_0 = arith.constant 0 : i32
    return %arg0, %c0_i32 : i32, i32
  }
  func.func @transform_5(%arg0: i32) -> (i32, i32) {
    %c0_i32 = arith.constant 0 : i32
    %c0_i32_0 = arith.constant 0 : i32
    %c0_i32_1 = arith.constant 0 : i32
    return %c0_i32, %c0_i32_0 : i32, i32
  }
  func.func @transform_6(%arg0: i32) -> (i32, i32) {
    %c0_i32 = arith.constant 0 : i32
    %c0_i32_0 = arith.constant 0 : i32
    %c0_i32_1 = arith.constant 0 : i32
    return %c0_i32, %c0_i32_0 : i32, i32
  }
  func.func @transform_7(%arg0: i32) -> (i32, i32) {
    %c0_i32 = arith.constant 0 : i32
    %c0_i32_0 = arith.constant 0 : i32
    return %arg0, %c0_i32 : i32, i32
  }
}

</mosaic_0001>

<llo_original>
// kernel: tpu_custom_call.1
$region0: #{tpu_custom_call.1}
  #allocation0 [shape = 'u32[]', space=smem, size = 0x4, offset = 0x4, fixed_abs, tag = 'smem constant byte address 0x4 - core index']
  #allocation1 [shape = 'u32[144,128]{1,0:T(1,128)}', space=vmem, size = 0x12000, scoped, tag = 'internal scratch']
  %s0 = inlined_call_operand.hbm [shape: f32[2,32], index: 0, kind: input, shape index: {}]
  %s1 = inlined_call_operand.hbm [shape: f32[2,16,32], index: 1, kind: input, shape index: {}]
  %s2 = inlined_call_operand.hbm [shape: f32[2,256], index: 2, kind: input, shape index: {}]
  %s3 = inlined_call_operand.hbm [shape: f32[2,16,256], index: 3, kind: input, shape index: {}]
  %s4 = inlined_call_operand.vmem [shape: f32[2,16], index: 4, kind: input, shape index: {}]
  %s5 = inlined_call_operand.hbm [shape: f32[32,33], index: 5, kind: input, shape index: {}]
  %s6 = inlined_call_operand.vmem [shape: f32[1,33], index: 6, kind: input, shape index: {}]
  %s7 = inlined_call_operand.hbm [shape: f32[2,256], index: 7, kind: output, shape index: {}]
  %s8 = sld [smem:[#allocation0]]
  $region58: #{tpu_custom_call.1} parent=0
    _
  %s10 = ssub.s32 1, %s8
  %s11 = scalar_select 0, %s10, %s8
  $region1: #{tpu_custom_call.1} parent=0
    #allocation2 [shape = 'u8[1024]{0}', space=vmem, size = 0x400, scoped, tag = 'input window, operand 0, single buffered']
    #allocation3 [shape = 's32[1]{0}', space=sflag, size = 0x4, scoped, tag = 'scoped memory for tpu_custom_call.1']
    #allocation4 [shape = 's32[1]{0}', space=sflag, size = 0x4, scoped, tag = 'scoped memory for tpu_custom_call.1']
    #allocation5 [shape = 'u8[16384]{0}', space=vmem, size = 0x4000, scoped, tag = 'input window, operand 1, single buffered']
    #allocation6 [shape = 's32[1]{0}', space=sflag, size = 0x4, scoped, tag = 'scoped memory for tpu_custom_call.1']
    #allocation7 [shape = 'u8[2048]{0}', space=vmem, size = 0x800, scoped, tag = 'input window, operand 2, single buffered']
    #allocation8 [shape = 'u8[32768]{0}', space=vmem, size = 0x8000, scoped, tag = 'input window, operand 3, single buffered']
    #allocation9 [shape = 's32[1]{0}', space=sflag, size = 0x4, scoped, tag = 'scoped memory for tpu_custom_call.1']
    #allocation10 [shape = 'u8[16384]{0}', space=vmem, size = 0x4000, scoped, tag = 'input window, operand 5, single buffered']
    #allocation11 [shape = 'u8[2048]{0}', space=vmem, size = 0x800, scoped, tag = 'output window, operand 0, single buffered']
    %12 = vsyncpa [#allocation3], 0
    %13 = vsyncpa [#allocation6], 0
    %14 = vsyncpa [#allocation9], 0
    %15 = vsyncpa [#allocation4], 0
    // Predicated region
    $region2: #{tpu_custom_call.1} parent=1 // pred_check
      _
    $region3: #{tpu_custom_call.1} parent=1 // pred_check_branch
      %17 = sbr.rel (0) target = $region5
    $region4: #{tpu_custom_call.1} parent=1 // pred_region
      %s19 = ssub.s32 32, 32
      %20 = vsyncadd [#allocation3], %s19
      %s22 = sshll.u32 [#allocation2], 4
      %s23 = int_to_ptr.vmem [resolvable:$true] %s22
      %25 = dma.hbm_to_vmem [thread:$0]  %s0, 32, %s23, [#allocation3]
    $region5: #{tpu_custom_call.1} parent=1 // pred_fallthru
      _
    // Predicated region
    $region6: #{tpu_custom_call.1} parent=1 // pred_check
      _
    $region7: #{tpu_custom_call.1} parent=1 // pred_check_branch
      %27 = sbr.rel (0) target = $region9
    $region8: #{tpu_custom_call.1} parent=1 // pred_region
      %s29 = ssub.s32 512, 512
      %30 = vsyncadd [#allocation6], %s29
      %s31 = sshll.u32 [#allocation5], 4
      %s32 = int_to_ptr.vmem [resolvable:$true] %s31
      %37 = dma.hbm_to_vmem [thread:$0]  %s1, 512, %s32, [#allocation6], 128, 128, 8
    $region9: #{tpu_custom_call.1} parent=1 // pred_fallthru
      _
    // Predicated region
    $region10: #{tpu_custom_call.1} parent=1 // pred_check
      _
    $region11: #{tpu_custom_call.1} parent=1 // pred_check_branch
      %39 = sbr.rel (0) target = $region13
    $region12: #{tpu_custom_call.1} parent=1 // pred_region
      %s41 = ssub.s32 64, 64
      %42 = vsyncadd [#allocation6], %s41
      %s44 = sshll.u32 [#allocation7], 4
      %s45 = int_to_ptr.vmem [resolvable:$true] %s44
      %47 = dma.hbm_to_vmem [thread:$0]  %s2, 64, %s45, [#allocation6]
    $region13: #{tpu_custom_call.1} parent=1 // pred_fallthru
      _
    // Predicated region
    $region14: #{tpu_custom_call.1} parent=1 // pred_check
      _
    $region15: #{tpu_custom_call.1} parent=1 // pred_check_branch
      %49 = sbr.rel (0) target = $region17
    $region16: #{tpu_custom_call.1} parent=1 // pred_region
      %s51 = ssub.s32 1024, 1024
      %52 = vsyncadd [#allocation9], %s51
      %s53 = sshll.u32 [#allocation8], 4
      %s54 = int_to_ptr.vmem [resolvable:$true] %s53
      %59 = dma.hbm_to_vmem [thread:$0]  %s3, 1024, %s54, [#allocation9], 256, 256, 16
    $region17: #{tpu_custom_call.1} parent=1 // pred_fallthru
      _
    // Predicated region
    $region18: #{tpu_custom_call.1} parent=1 // pred_check
      _
    $region19: #{tpu_custom_call.1} parent=1 // pred_check_branch
      %61 = sbr.rel (0) target = $region21
    $region20: #{tpu_custom_call.1} parent=1 // pred_region
      _
    $region21: #{tpu_custom_call.1} parent=1 // pred_fallthru
      _
    // Predicated region
    $region22: #{tpu_custom_call.1} parent=1 // pred_check
      _
    $region23: #{tpu_custom_call.1} parent=1 // pred_check_branch
      %63 = sbr.rel (0) target = $region25
    $region24: #{tpu_custom_call.1} parent=1 // pred_region
      %s65 = ssub.s32 512, 512
      %66 = vsyncadd [#allocation9], %s65
      %s67 = sshll.u32 [#allocation10], 4
      %s68 = int_to_ptr.vmem [resolvable:$true] %s67
      %73 = dma.hbm_to_vmem [thread:$0]  %s5, 512, %s68, [#allocation9], 128, 128, 8
    $region25: #{tpu_custom_call.1} parent=1 // pred_fallthru
      _
    // Predicated region
    $region26: #{tpu_custom_call.1} parent=1 // pred_check
      _
    $region27: #{tpu_custom_call.1} parent=1 // pred_check_branch
      %75 = sbr.rel (0) target = $region29
    $region28: #{tpu_custom_call.1} parent=1 // pred_region
      _
    $region29: #{tpu_custom_call.1} parent=1 // pred_fallthru
      _
    // Predicated region
    $region30: #{tpu_custom_call.1} parent=1 // pred_check
      _
    $region31: #{tpu_custom_call.1} parent=1 // pred_check_branch
      %77 = sbr.rel (0) target = $region33
    $region32: #{tpu_custom_call.1} parent=1 // pred_region
      %78 = dma.done [#allocation3], 32
    $region33: #{tpu_custom_call.1} parent=1 // pred_fallthru
      _
    // Predicated region
    $region34: #{tpu_custom_call.1} parent=1 // pred_check
      _
    $region35: #{tpu_custom_call.1} parent=1 // pred_check_branch
      %80 = sbr.rel (0) target = $region37
    $region36: #{tpu_custom_call.1} parent=1 // pred_region
      %81 = dma.done [#allocation6], 512
    $region37: #{tpu_custom_call.1} parent=1 // pred_fallthru
      _
    // Predicated region
    $region38: #{tpu_custom_call.1} parent=1 // pred_check
      _
    $region39: #{tpu_custom_call.1} parent=1 // pred_check_branch
      %83 = sbr.rel (0) target = $region41
    $region40: #{tpu_custom_call.1} parent=1 // pred_region
      %84 = dma.done [#allocation6], 64
    $region41: #{tpu_custom_call.1} parent=1 // pred_fallthru
      _
    // Predicated region
    $region42: #{tpu_custom_call.1} parent=1 // pred_check
      _
    $region43: #{tpu_custom_call.1} parent=1 // pred_check_branch
      %86 = sbr.rel (0) target = $region45
    $region44: #{tpu_custom_call.1} parent=1 // pred_region
      %87 = dma.done [#allocation9], 1024
    $region45: #{tpu_custom_call.1} parent=1 // pred_fallthru
      _
    // Predicated region
    $region46: #{tpu_custom_call.1} parent=1 // pred_check
      _
    $region47: #{tpu_custom_call.1} parent=1 // pred_check_branch
      %89 = sbr.rel (0) target = $region49
    $region48: #{tpu_custom_call.1} parent=1 // pred_region
      %90 = dma.done [#allocation9], 512
    $region49: #{tpu_custom_call.1} parent=1 // pred_fallthru
      _
    %v91 = vld [vmem:[#allocation2] sm:$0x3]
    %v92 = vld [vmem:[#allocation10] sm:$0xff]
    %v93 = vld [vmem:[#allocation10 + $0x8] sm:$0xff]
    %v94 = vld [vmem:[#allocation10 + $0x10] sm:$0xff]
    %v95 = vld [vmem:[#allocation10 + $0x18] sm:$0xff]
    %v96 = vld [vmem:[%s6] sm:$0x1]
    %v98 = vlaneseq
    %v99 = vshrl.u32 %v98, 7
    %v100 = vsub.s32 0, %v99
    %v101 = vrot.slane %v96, %v100
    %vm103 = vcmask 261120
    %v105 = vsel %vm103, %v91, 0
    %107 = vmatprep.subr.mxu0 0.0
    %108 = vmatpush1.msra.mxu0 0.0
    %109 = vmatprep.subr.mxu0 0.0
    %110 = vmatpush1.msra.mxu0 0.0
    %111 = vmatprep.subr.mxu0 0.0
    %112 = vmatpush1.msra.mxu0 0.0
    %113 = vmatprep.subr.mxu0 0.0
    %114 = vmatpush1.msra.mxu0 0.0
    %115 = vmatprep.subr.mxu0 0.0
    %116 = vmatpush1.msra.mxu0 0.0
    %117 = vmatprep.subr.mxu0 0.0
    %118 = vmatpush1.msra.mxu0 0.0
    %119 = vmatprep.subr.mxu0 0.0
    %120 = vmatpush1.msra.mxu0 0.0
    %121 = vmatprep.subr.mxu0 0.0
    %122 = vmatpush1.msra.mxu0 0.0
    %123 = vmatprep.subr.mxu0 0.0
    %124 = vmatpush1.msra.mxu0 0.0
    %125 = vmatprep.subr.mxu0 0.0
    %126 = vmatpush1.msra.mxu0 0.0
    %127 = vmatprep.subr.mxu0 0.0
    %128 = vmatpush1.msra.mxu0 0.0
    %129 = vmatprep.subr.mxu0 0.0
    %130 = vmatpush1.msra.mxu0 0.0
    %131 = vmatprep.subr.mxu0 0.0
    %132 = vmatpush1.msra.mxu0 %v95
    %133 = vmatprep.subr.mxu0 0.0
    %134 = vmatpush1.msra.mxu0 %v94
    %135 = vmatprep.subr.mxu0 0.0
    %136 = vmatpush1.msra.mxu0 %v93
    %137 = vmatprep.subr.mxu0 0.0
    %138 = vmatpush1.msra.mxu0 %v92
    %139 = vmatprep.subr.mxu0 0.0
    %140 = vmatpush2.msra.mxu0 0.0
    %141 = vmatprep.subr.mxu0 0.0
    %142 = vmatpush2.msra.mxu0 0.0
    %143 = vmatprep.subr.mxu0 0.0
    %144 = vmatpush2.msra.mxu0 0.0
    %145 = vmatprep.subr.mxu0 0.0
    %146 = vmatpush2.msra.mxu0 0.0
    %147 = vmatprep.subr.mxu0 0.0
    %148 = vmatpush2.msra.mxu0 0.0
    %149 = vmatprep.subr.mxu0 0.0
    %150 = vmatpush2.msra.mxu0 0.0
    %151 = vmatprep.subr.mxu0 0.0
    %152 = vmatpush2.msra.mxu0 0.0
    %153 = vmatprep.subr.mxu0 0.0
    %154 = vmatpush2.msra.mxu0 0.0
    %155 = vmatprep.subr.mxu0 0.0
    %156 = vmatpush2.msra.mxu0 0.0
    %157 = vmatprep.subr.mxu0 0.0
    %158 = vmatpush2.msra.mxu0 0.0
    %159 = vmatprep.subr.mxu0 0.0
    %160 = vmatpush2.msra.mxu0 0.0
    %161 = vmatprep.subr.mxu0 0.0
    %162 = vmatpush2.msra.mxu0 0.0
    %163 = vmatprep.subr.mxu0 0.0
    %164 = vmatpush2.msra.mxu0 0.0
    %165 = vmatprep.subr.mxu0 0.0
    %166 = vmatpush2.msra.mxu0 0.0
    %167 = vmatprep.subr.mxu0 0.0
    %168 = vmatpush2.msra.mxu0 0.0
    %169 = vmatprep.subr.mxu0 0.0
    %170 = vmatpush2.msra.mxu0 0.0
    %171 = vmatprep.mubr.f32.mxu0 0.0
    %172 = vmatmul.mubr.f32.gmra.mxu0 %v105
    %v173 = vpop.f32.mrf.mxu0
    %v174 = vadd.f32 %v101, %v173
    %v175 = vpop.f32.mrf.mxu0
    %176 = vdwg.mxu0
    %v179 = vunpack.c.l.s4 1966171168
    %v180 = vunpack.c.0.s8 %v179
    %v181 = vlaneseq
    %v182 = vshrl.u32 %v181, 7
    %v183 = vsub.s32 %v180, %v182
    %v184 = vrot.slane %v174, %v183
    %v185 = vcombine.high %v184, %v184
    %v187 = vunpack.c.l.s4 1966171168
    %v188 = vunpack.c.0.s8 %v187
    %v189 = vlaneseq
    %v190 = vshrl.u32 %v189, 7
    %v191 = vsub.s32 %v188, %v190
    %v192 = vrot.slane %v184, %v191
    %v194 = vunpack.c.l.s4 1966171168
    %v195 = vunpack.c.0.s8 %v194
    %v196 = vlaneseq
    %v197 = vshrl.u32 %v196, 7
    %v198 = vsub.s32 %v195, %v197
    %v199 = vrot.slane %v185, %v198
    %v200 = vld [vmem:[#allocation5] sm:$0xff]
    %v201 = vld [vmem:[#allocation5 + $0x8] sm:$0xff]
    %v202 = vld [vmem:[#allocation5 + $0x10] sm:$0xff]
    %v203 = vld [vmem:[#allocation5 + $0x18] sm:$0xff]
    %v204 = vlaneseq
    %v205 = vshrl.u32 %v204, 7
    %v206 = vsub.s32 0, %v205
    %v207 = vrot.slane %v192, %v206
    %v208 = vlaneseq
    %v209 = vshrl.u32 %v208, 7
    %v210 = vsub.s32 0, %v209
    %v211 = vrot.slane %v199, %v210
    %v214 = vmul.f32 %v207, %v200
    %v215 = vmul.f32 %v207, %v201
    %v216 = vmul.f32 %v211, %v202
    %v217 = vmul.f32 %v211, %v203
    %v218 = vsel %vm103, %v214, 0.0
    %219 = vadd.xlane.f32.xlu0 %v218
    %v220 = vpop.xlane.xlu0 %219
    %v221 = vsel %vm103, %v215, 0.0
    %222 = vadd.xlane.f32.xlu0 %v221
    %v223 = vpop.xlane.xlu0 %222
    %v224 = vsel %vm103, %v216, 0.0
    %225 = vadd.xlane.f32.xlu0 %v224
    %v226 = vpop.xlane.xlu0 %225
    %v227 = vsel %vm103, %v217, 0.0
    %228 = vadd.xlane.f32.xlu0 %v227
    %v229 = vpop.xlane.xlu0 %228
    %230 = vset.pattern.permute.xlu0 32
    %231 = vperm.xlu0 %230, %v174
    %v232 = vpop.permute.xlu0 %231
    %v233 = vlaneseq
    %v234 = vshrl.u32 %v233, 7
    %v235 = vsub.s32 0, %v234
    %v236 = vrot.slane %v232, %v235
    %v237 = vlaneseq
    %v238 = vshrl.u32 %v237, 7
    %v239 = vsub.s32 1, %v238
    %v240 = vrot.slane %v232, %v239
    %v243 = vadd.f32 %v220, %v236
    %v244 = vadd.f32 %v223, %v236
    %v245 = vadd.f32 %v226, %v240
    %v246 = vadd.f32 %v229, %v240
    %v247 = vmul.f32 %v243, 0.17677669
    %v248 = vmul.f32 %v244, 0.17677669
    %v249 = vmul.f32 %v245, 0.17677669
    %v250 = vmul.f32 %v246, 0.17677669
    %v251 = vld [vmem:[%s4] sm:$0x3]
    %v252 = vadd.f32 %v251, 1e-09
    %v253 = vrcp.pop %v252
    %v255 = vlaneseq
    %v256 = vshrl.u32 %v255, 7
    %v257 = vsub.s32 0, %v256
    %v258 = vrot.slane %v253, %v257
    %260 = vbcast.lane.b32.xlu0 %v258, 256
    %v261 = vpop.permute.xlu0 %260
    %s263 = sor.u32 256, 8
    %264 = vbcast.lane.b32.xlu0 %v258, %s263
    %v265 = vpop.permute.xlu0 %264
    %v266 = vlaneseq
    %v267 = vshrl.u32 %v266, 7
    %v268 = vsub.s32 1, %v267
    %v269 = vrot.slane %v253, %v268
    %271 = vbcast.lane.b32.xlu0 %v269, 256
    %v272 = vpop.permute.xlu0 %271
    %s274 = sor.u32 256, 8
    %275 = vbcast.lane.b32.xlu0 %v269, %s274
    %v276 = vpop.permute.xlu0 %275
    %v281 = vmul.f32 %v247, %v261
    %v282 = vmul.f32 %v248, %v265
    %v283 = vmul.f32 %v249, %v272
    %v284 = vmul.f32 %v250, %v276
    %289 = vset.pattern.permute.xlu0 0
    %290 = vperm.xlu0 %289, %v281
    %v291 = vpop.permute.xlu0 %290
    %292 = vset.pattern.permute.xlu0 0
    %293 = vperm.xlu0 %292, %v282
    %v294 = vpop.permute.xlu0 %293
    %295 = vset.pattern.permute.xlu0 0
    %296 = vperm.xlu0 %295, %v283
    %v297 = vpop.permute.xlu0 %296
    %298 = vset.pattern.permute.xlu0 0
    %299 = vperm.xlu0 %298, %v284
    %v300 = vpop.permute.xlu0 %299
    %v301 = vlaneseq
    %v302 = vand.u32 %v301, 127
    %v303 = vlaneseq
    %v304 = vshrl.u32 %v303, 7
    %v305 = vsub.s32 %v302, %v304
    %v306 = vrot.slane %v291, %v305
    %v307 = vadd.s32 %v302, 4294967288
    %v308 = vlaneseq
    %v309 = vshrl.u32 %v308, 7
    %v310 = vsub.s32 %v307, %v309
    %v311 = vrot.slane %v294, %v310
    %vm312 = vcmask 130112
    %v313 = vsel %vm312, %v311, %v306
    %v314 = vlaneseq
    %v315 = vshrl.u32 %v314, 7
    %v316 = vsub.s32 %v302, %v315
    %v317 = vrot.slane %v297, %v316
    %v318 = vlaneseq
    %v319 = vshrl.u32 %v318, 7
    %v320 = vsub.s32 %v307, %v319
    %v321 = vrot.slane %v300, %v320
    %v322 = vsel %vm312, %v321, %v317
    %vm323 = vcmask 1041409
    %v324 = vsel %vm323, %v322, %v313
    %vm326 = vcmask 123904
    %v327 = vsel %vm326, %v324, -inf
    %328 = vmax.xlane.f32.xlu0 %v327
    %v329 = vpop.xlane.xlu0 %328
    %v331 = vlaneseq
    %v332 = vshrl.u32 %v331, 7
    %v333 = vsub.s32 0, %v332
    %v334 = vrot.slane %v329, %v333
    %v335 = vlaneseq
    %v336 = vshrl.u32 %v335, 7
    %v337 = vsub.s32 1, %v336
    %v338 = vrot.slane %v329, %v337
    %v341 = vsub.f32 %v281, %v334
    %v342 = vsub.f32 %v282, %v334
    %v343 = vsub.f32 %v283, %v338
    %v344 = vsub.f32 %v284, %v338
    %v345 = vmul.f32 %v341, 1.442695
    %v346 = vpow.pop %v345
    %v347 = vmul.f32 %v342, 1.442695
    %v348 = vpow.pop %v347
    %v349 = vmul.f32 %v343, 1.442695
    %v350 = vpow.pop %v349
    %v351 = vmul.f32 %v344, 1.442695
    %v352 = vpow.pop %v351
    %357 = vset.pattern.permute.xlu0 0
    %358 = vperm.xlu0 %357, %v346
    %v359 = vpop.permute.xlu0 %358
    %360 = vset.pattern.permute.xlu0 0
    %361 = vperm.xlu0 %360, %v348
    %v362 = vpop.permute.xlu0 %361
    %363 = vset.pattern.permute.xlu0 0
    %364 = vperm.xlu0 %363, %v350
    %v365 = vpop.permute.xlu0 %364
    %366 = vset.pattern.permute.xlu0 0
    %367 = vperm.xlu0 %366, %v352
    %v368 = vpop.permute.xlu0 %367
    %v369 = vlaneseq
    %v370 = vshrl.u32 %v369, 7
    %v371 = vsub.s32 %v302, %v370
    %v372 = vrot.slane %v359, %v371
    %v373 = vlaneseq
    %v374 = vshrl.u32 %v373, 7
    %v375 = vsub.s32 %v307, %v374
    %v376 = vrot.slane %v362, %v375
    %v377 = vsel %vm312, %v376, %v372
    %v378 = vlaneseq
    %v379 = vshrl.u32 %v378, 7
    %v380 = vsub.s32 %v302, %v379
    %v381 = vrot.slane %v365, %v380
    %v382 = vlaneseq
    %v383 = vshrl.u32 %v382, 7
    %v384 = vsub.s32 %v307, %v383
    %v385 = vrot.slane %v368, %v384
    %v386 = vsel %vm312, %v385, %v381
    %v387 = vsel %vm323, %v386, %v377
    %v389 = vsel %vm326, %v387, 0.0
    %390 = vadd.xlane.f32.xlu0 %v389
    %v391 = vpop.xlane.xlu0 %390
    %v392 = vrcp.pop %v391
    %v394 = vlaneseq
    %v395 = vshrl.u32 %v394, 7
    %v396 = vsub.s32 0, %v395
    %v397 = vrot.slane %v392, %v396
    %v398 = vlaneseq
    %v399 = vshrl.u32 %v398, 7
    %v400 = vsub.s32 1, %v399
    %v401 = vrot.slane %v392, %v400
    %v404 = vmul.f32 %v346, %v397
    %v405 = vmul.f32 %v348, %v397
    %v406 = vmul.f32 %v350, %v401
    %v407 = vmul.f32 %v352, %v401
    %vm408 = vcmp.eq.s32.totalorder %v302, 12
    %v409 = vsel %vm408, 1, 0
    %vm410 = vcmp.eq.s32.totalorder %v409, 1
    %415 = vset.pattern.permute.xlu0 0
    %416 = vperm.xlu0 %415, %v404
    %v417 = vpop.permute.xlu0 %416
    %418 = vset.pattern.permute.xlu0 0
    %419 = vperm.xlu0 %418, %v405
    %v420 = vpop.permute.xlu0 %419
    %421 = vset.pattern.permute.xlu0 0
    %422 = vperm.xlu0 %421, %v406
    %v423 = vpop.permute.xlu0 %422
    %424 = vset.pattern.permute.xlu0 0
    %425 = vperm.xlu0 %424, %v407
    %v426 = vpop.permute.xlu0 %425
    %v427 = vlaneseq
    %v428 = vshrl.u32 %v427, 7
    %v429 = vsub.s32 %v302, %v428
    %v430 = vrot.slane %v417, %v429
    %v431 = vlaneseq
    %v432 = vshrl.u32 %v431, 7
    %v433 = vsub.s32 %v307, %v432
    %v434 = vrot.slane %v420, %v433
    %v435 = vsel %vm312, %v434, %v430
    %v436 = vlaneseq
    %v437 = vshrl.u32 %v436, 7
    %v438 = vsub.s32 %v302, %v437
    %v439 = vrot.slane %v423, %v438
    %v440 = vlaneseq
    %v441 = vshrl.u32 %v440, 7
    %v442 = vsub.s32 %v307, %v441
    %v443 = vrot.slane %v426, %v442
    %v444 = vsel %vm312, %v443, %v439
    %v445 = vsel %vm323, %v444, %v435
    %v447 = vsel %vm410, 0.0, %v445
    %v448 = vld [vmem:[#allocation8] sm:$0xff]
    %v449 = vld [vmem:[#allocation8 + $0x8] sm:$0xff]
    %v450 = vld [vmem:[#allocation8 + $0x10] sm:$0xff]
    %v451 = vld [vmem:[#allocation8 + $0x18] sm:$0xff]
    %v452 = vld [vmem:[#allocation8 + $0x20] sm:$0xff]
    %v453 = vld [vmem:[#allocation8 + $0x28] sm:$0xff]
    %v454 = vld [vmem:[#allocation8 + $0x30] sm:$0xff]
    %v455 = vld [vmem:[#allocation8 + $0x38] sm:$0xff]
    %v456 = vlaneseq
    %v457 = vshrl.u32 %v456, 7
    %v458 = vsub.s32 0, %v457
    %v459 = vrot.slane %v447, %v458
    %461 = vbcast.lane.b32.xlu0 %v459, 256
    %v462 = vpop.permute.xlu0 %461
    %s464 = sor.u32 256, 8
    %465 = vbcast.lane.b32.xlu0 %v459, %s464
    %v466 = vpop.permute.xlu0 %465
    %v467 = vlaneseq
    %v468 = vshrl.u32 %v467, 7
    %v469 = vsub.s32 1, %v468
    %v470 = vrot.slane %v447, %v469
    %472 = vbcast.lane.b32.xlu0 %v470, 256
    %v473 = vpop.permute.xlu0 %472
    %s475 = sor.u32 256, 8
    %476 = vbcast.lane.b32.xlu0 %v470, %s475
    %v477 = vpop.permute.xlu0 %476
    %v478 = vmul.f32 %v462, %v448
    %v479 = vmul.f32 %v462, %v449
    %v480 = vmul.f32 %v466, %v450
    %v481 = vmul.f32 %v466, %v451
    %v482 = vmul.f32 %v473, %v452
    %v483 = vmul.f32 %v473, %v453
    %v484 = vmul.f32 %v477, %v454
    %v485 = vmul.f32 %v477, %v455
    %v486 = vadd.f32 %v478, %v480
    %v487 = vrot.slane %v486, 4
    %v488 = vadd.f32 %v486, %v487
    %v489 = vrot.slane %v488, 2
    %v490 = vadd.f32 %v488, %v489
    %v491 = vrot.slane %v490, 1
    %v492 = vadd.f32 %v490, %v491
    %v493 = vadd.f32 %v479, %v481
    %v494 = vrot.slane %v493, 4
    %v495 = vadd.f32 %v493, %v494
    %v496 = vrot.slane %v495, 2
    %v497 = vadd.f32 %v495, %v496
    %v498 = vrot.slane %v497, 1
    %v499 = vadd.f32 %v497, %v498
    %v500 = vadd.f32 %v482, %v484
    %v501 = vrot.slane %v500, 4
    %v502 = vadd.f32 %v500, %v501
    %v503 = vrot.slane %v502, 2
    %v504 = vadd.f32 %v502, %v503
    %v505 = vrot.slane %v504, 1
    %v506 = vadd.f32 %v504, %v505
    %v507 = vadd.f32 %v483, %v485
    %v508 = vrot.slane %v507, 4
    %v509 = vadd.f32 %v507, %v508
    %v510 = vrot.slane %v509, 2
    %v511 = vadd.f32 %v509, %v510
    %v512 = vrot.slane %v511, 1
    %v513 = vadd.f32 %v511, %v512
    %v514 = vld [vmem:[#allocation7] sm:$0xf]
    %v515 = vlaneseq
    %v516 = vshrl.u32 %v515, 7
    %v517 = vsub.s32 4, %v516
    %v518 = vrot.slane %v405, %v517
    %v519 = vlaneseq
    %v520 = vshrl.u32 %v519, 7
    %v521 = vsub.s32 4, %v520
    %v522 = vrot.slane %v407, %v521
    %v525 = vunpack.c.l.s4 1983009808
    %v526 = vunpack.c.0.s8 %v525
    %v527 = vlaneseq
    %v528 = vshrl.u32 %v527, 7
    %v529 = vsub.s32 %v526, %v528
    %v530 = vrot.slane %v514, %v529
    %v531 = vcombine.high %v530, %v530
    %v532 = vlaneseq
    %v533 = vshrl.u32 %v532, 7
    %v534 = vsub.s32 0, %v533
    %v535 = vrot.slane %v530, %v534
    %537 = vbcast.lane.b32.xlu0 %v535, 256
    %v538 = vpop.permute.xlu0 %537
    %s540 = sor.u32 256, 8
    %541 = vbcast.lane.b32.xlu0 %v535, %s540
    %v542 = vpop.permute.xlu0 %541
    %s544 = sor.u32 256, 16
    %545 = vbcast.lane.b32.xlu0 %v535, %s544
    %v546 = vpop.permute.xlu0 %545
    %s548 = sor.u32 256, 24
    %549 = vbcast.lane.b32.xlu0 %v535, %s548
    %v550 = vpop.permute.xlu0 %549
    %s552 = sor.u32 256, 32
    %553 = vbcast.lane.b32.xlu0 %v535, %s552
    %v554 = vpop.permute.xlu0 %553
    %s556 = sor.u32 256, 40
    %557 = vbcast.lane.b32.xlu0 %v535, %s556
    %v558 = vpop.permute.xlu0 %557
    %s560 = sor.u32 256, 48
    %561 = vbcast.lane.b32.xlu0 %v535, %s560
    %v562 = vpop.permute.xlu0 %561
    %s564 = sor.u32 256, 56
    %565 = vbcast.lane.b32.xlu0 %v535, %s564
    %v566 = vpop.permute.xlu0 %565
    %s568 = sor.u32 256, 64
    %569 = vbcast.lane.b32.xlu0 %v535, %s568
    %v570 = vpop.permute.xlu0 %569
    %s572 = sor.u32 256, 72
    %573 = vbcast.lane.b32.xlu0 %v535, %s572
    %v574 = vpop.permute.xlu0 %573
    %s576 = sor.u32 256, 80
    %577 = vbcast.lane.b32.xlu0 %v535, %s576
    %v578 = vpop.permute.xlu0 %577
    %s580 = sor.u32 256, 88
    %581 = vbcast.lane.b32.xlu0 %v535, %s580
    %v582 = vpop.permute.xlu0 %581
    %s584 = sor.u32 256, 96
    %585 = vbcast.lane.b32.xlu0 %v535, %s584
    %v586 = vpop.permute.xlu0 %585
    %s588 = sor.u32 256, 104
    %589 = vbcast.lane.b32.xlu0 %v535, %s588
    %v590 = vpop.permute.xlu0 %589
    %s592 = sor.u32 256, 112
    %593 = vbcast.lane.b32.xlu0 %v535, %s592
    %v594 = vpop.permute.xlu0 %593
    %s596 = sor.u32 256, 120
    %597 = vbcast.lane.b32.xlu0 %v535, %s596
    %v598 = vpop.permute.xlu0 %597
    %v599 = vlaneseq
    %v600 = vshrl.u32 %v599, 7
    %v601 = vsub.s32 0, %v600
    %v602 = vrot.slane %v531, %v601
    %604 = vbcast.lane.b32.xlu0 %v602, 256
    %v605 = vpop.permute.xlu0 %604
    %s607 = sor.u32 256, 8
    %608 = vbcast.lane.b32.xlu0 %v602, %s607
    %v609 = vpop.permute.xlu0 %608
    %s611 = sor.u32 256, 16
    %612 = vbcast.lane.b32.xlu0 %v602, %s611
    %v613 = vpop.permute.xlu0 %612
    %s615 = sor.u32 256, 24
    %616 = vbcast.lane.b32.xlu0 %v602, %s615
    %v617 = vpop.permute.xlu0 %616
    %s619 = sor.u32 256, 32
    %620 = vbcast.lane.b32.xlu0 %v602, %s619
    %v621 = vpop.permute.xlu0 %620
    %s623 = sor.u32 256, 40
    %624 = vbcast.lane.b32.xlu0 %v602, %s623
    %v625 = vpop.permute.xlu0 %624
    %s627 = sor.u32 256, 48
    %628 = vbcast.lane.b32.xlu0 %v602, %s627
    %v629 = vpop.permute.xlu0 %628
    %s631 = sor.u32 256, 56
    %632 = vbcast.lane.b32.xlu0 %v602, %s631
    %v633 = vpop.permute.xlu0 %632
    %s635 = sor.u32 256, 64
    %636 = vbcast.lane.b32.xlu0 %v602, %s635
    %v637 = vpop.permute.xlu0 %636
    %s639 = sor.u32 256, 72
    %640 = vbcast.lane.b32.xlu0 %v602, %s639
    %v641 = vpop.permute.xlu0 %640
    %s643 = sor.u32 256, 80
    %644 = vbcast.lane.b32.xlu0 %v602, %s643
    %v645 = vpop.permute.xlu0 %644
    %s647 = sor.u32 256, 88
    %648 = vbcast.lane.b32.xlu0 %v602, %s647
    %v649 = vpop.permute.xlu0 %648
    %s651 = sor.u32 256, 96
    %652 = vbcast.lane.b32.xlu0 %v602, %s651
    %v653 = vpop.permute.xlu0 %652
    %s655 = sor.u32 256, 104
    %656 = vbcast.lane.b32.xlu0 %v602, %s655
    %v657 = vpop.permute.xlu0 %656
    %s659 = sor.u32 256, 112
    %660 = vbcast.lane.b32.xlu0 %v602, %s659
    %v661 = vpop.permute.xlu0 %660
    %s663 = sor.u32 256, 120
    %664 = vbcast.lane.b32.xlu0 %v602, %s663
    %v665 = vpop.permute.xlu0 %664
    %v666 = vlaneseq
    %v667 = vshrl.u32 %v666, 7
    %v668 = vsub.s32 1, %v667
    %v669 = vrot.slane %v530, %v668
    %671 = vbcast.lane.b32.xlu0 %v669, 256
    %v672 = vpop.permute.xlu0 %671
    %s674 = sor.u32 256, 8
    %675 = vbcast.lane.b32.xlu0 %v669, %s674
    %v676 = vpop.permute.xlu0 %675
    %s678 = sor.u32 256, 16
    %679 = vbcast.lane.b32.xlu0 %v669, %s678
    %v680 = vpop.permute.xlu0 %679
    %s682 = sor.u32 256, 24
    %683 = vbcast.lane.b32.xlu0 %v669, %s682
    %v684 = vpop.permute.xlu0 %683
    %s686 = sor.u32 256, 32
    %687 = vbcast.lane.b32.xlu0 %v669, %s686
    %v688 = vpop.permute.xlu0 %687
    %s690 = sor.u32 256, 40
    %691 = vbcast.lane.b32.xlu0 %v669, %s690
    %v692 = vpop.permute.xlu0 %691
    %s694 = sor.u32 256, 48
    %695 = vbcast.lane.b32.xlu0 %v669, %s694
    %v696 = vpop.permute.xlu0 %695
    %s698 = sor.u32 256, 56
    %699 = vbcast.lane.b32.xlu0 %v669, %s698
    %v700 = vpop.permute.xlu0 %699
    %s702 = sor.u32 256, 64
    %703 = vbcast.lane.b32.xlu0 %v669, %s702
    %v704 = vpop.permute.xlu0 %703
    %s706 = sor.u32 256, 72
    %707 = vbcast.lane.b32.xlu0 %v669, %s706
    %v708 = vpop.permute.xlu0 %707
    %s710 = sor.u32 256, 80
    %711 = vbcast.lane.b32.xlu0 %v669, %s710
    %v712 = vpop.permute.xlu0 %711
    %s714 = sor.u32 256, 88
    %715 = vbcast.lane.b32.xlu0 %v669, %s714
    %v716 = vpop.permute.xlu0 %715
    %s718 = sor.u32 256, 96
    %719 = vbcast.lane.b32.xlu0 %v669, %s718
    %v720 = vpop.permute.xlu0 %719
    %s722 = sor.u32 256, 104
    %723 = vbcast.lane.b32.xlu0 %v669, %s722
    %v724 = vpop.permute.xlu0 %723
    %s726 = sor.u32 256, 112
    %727 = vbcast.lane.b32.xlu0 %v669, %s726
    %v728 = vpop.permute.xlu0 %727
    %s730 = sor.u32 256, 120
    %731 = vbcast.lane.b32.xlu0 %v669, %s730
    %v732 = vpop.permute.xlu0 %731
    %v733 = vlaneseq
    %v734 = vshrl.u32 %v733, 7
    %v735 = vsub.s32 1, %v734
    %v736 = vrot.slane %v531, %v735
    %738 = vbcast.lane.b32.xlu0 %v736, 256
    %v739 = vpop.permute.xlu0 %738
    %s741 = sor.u32 256, 8
    %742 = vbcast.lane.b32.xlu0 %v736, %s741
    %v743 = vpop.permute.xlu0 %742
    %s745 = sor.u32 256, 16
    %746 = vbcast.lane.b32.xlu0 %v736, %s745
    %v747 = vpop.permute.xlu0 %746
    %s749 = sor.u32 256, 24
    %750 = vbcast.lane.b32.xlu0 %v736, %s749
    %v751 = vpop.permute.xlu0 %750
    %s753 = sor.u32 256, 32
    %754 = vbcast.lane.b32.xlu0 %v736, %s753
    %v755 = vpop.permute.xlu0 %754
    %s757 = sor.u32 256, 40
    %758 = vbcast.lane.b32.xlu0 %v736, %s757
    %v759 = vpop.permute.xlu0 %758
    %s761 = sor.u32 256, 48
    %762 = vbcast.lane.b32.xlu0 %v736, %s761
    %v763 = vpop.permute.xlu0 %762
    %s765 = sor.u32 256, 56
    %766 = vbcast.lane.b32.xlu0 %v736, %s765
    %v767 = vpop.permute.xlu0 %766
    %s769 = sor.u32 256, 64
    %770 = vbcast.lane.b32.xlu0 %v736, %s769
    %v771 = vpop.permute.xlu0 %770
    %s773 = sor.u32 256, 72
    %774 = vbcast.lane.b32.xlu0 %v736, %s773
    %v775 = vpop.permute.xlu0 %774
    %s777 = sor.u32 256, 80
    %778 = vbcast.lane.b32.xlu0 %v736, %s777
    %v779 = vpop.permute.xlu0 %778
    %s781 = sor.u32 256, 88
    %782 = vbcast.lane.b32.xlu0 %v736, %s781
    %v783 = vpop.permute.xlu0 %782
    %s785 = sor.u32 256, 96
    %786 = vbcast.lane.b32.xlu0 %v736, %s785
    %v787 = vpop.permute.xlu0 %786
    %s789 = sor.u32 256, 104
    %790 = vbcast.lane.b32.xlu0 %v736, %s789
    %v791 = vpop.permute.xlu0 %790
    %s793 = sor.u32 256, 112
    %794 = vbcast.lane.b32.xlu0 %v736, %s793
    %v795 = vpop.permute.xlu0 %794
    %s797 = sor.u32 256, 120
    %798 = vbcast.lane.b32.xlu0 %v736, %s797
    %v799 = vpop.permute.xlu0 %798
    %v864 = vmul.f32 %v518, %v538
    %v865 = vmul.f32 %v518, %v542
    %v866 = vmul.f32 %v518, %v546
    %v867 = vmul.f32 %v518, %v550
    %v868 = vmul.f32 %v518, %v554
    %v869 = vmul.f32 %v518, %v558
    %v870 = vmul.f32 %v518, %v562
    %v871 = vmul.f32 %v518, %v566
    %v872 = vmul.f32 %v518, %v570
    %v873 = vmul.f32 %v518, %v574
    %v874 = vmul.f32 %v518, %v578
    %v875 = vmul.f32 %v518, %v582
    %v876 = vmul.f32 %v518, %v586
    %v877 = vmul.f32 %v518, %v590
    %v878 = vmul.f32 %v518, %v594
    %v879 = vmul.f32 %v518, %v598
    %v880 = vmul.f32 %v518, %v605
    %v881 = vmul.f32 %v518, %v609
    %v882 = vmul.f32 %v518, %v613
    %v883 = vmul.f32 %v518, %v617
    %v884 = vmul.f32 %v518, %v621
    %v885 = vmul.f32 %v518, %v625
    %v886 = vmul.f32 %v518, %v629
    %v887 = vmul.f32 %v518, %v633
    %v888 = vmul.f32 %v518, %v637
    %v889 = vmul.f32 %v518, %v641
    %v890 = vmul.f32 %v518, %v645
    %v891 = vmul.f32 %v518, %v649
    %v892 = vmul.f32 %v518, %v653
    %v893 = vmul.f32 %v518, %v657
    %v894 = vmul.f32 %v518, %v661
    %v895 = vmul.f32 %v518, %v665
    %v896 = vmul.f32 %v522, %v672
    %v897 = vmul.f32 %v522, %v676
    %v898 = vmul.f32 %v522, %v680
    %v899 = vmul.f32 %v522, %v684
    %v900 = vmul.f32 %v522, %v688
    %v901 = vmul.f32 %v522, %v692
    %v902 = vmul.f32 %v522, %v696
    %v903 = vmul.f32 %v522, %v700
    %v904 = vmul.f32 %v522, %v704
    %v905 = vmul.f32 %v522, %v708
    %v906 = vmul.f32 %v522, %v712
    %v907 = vmul.f32 %v522, %v716
    %v908 = vmul.f32 %v522, %v720
    %v909 = vmul.f32 %v522, %v724
    %v910 = vmul.f32 %v522, %v728
    %v911 = vmul.f32 %v522, %v732
    %v912 = vmul.f32 %v522, %v739
    %v913 = vmul.f32 %v522, %v743
    %v914 = vmul.f32 %v522, %v747
    %v915 = vmul.f32 %v522, %v751
    %v916 = vmul.f32 %v522, %v755
    %v917 = vmul.f32 %v522, %v759
    %v918 = vmul.f32 %v522, %v763
    %v919 = vmul.f32 %v522, %v767
    %v920 = vmul.f32 %v522, %v771
    %v921 = vmul.f32 %v522, %v775
    %v922 = vmul.f32 %v522, %v779
    %v923 = vmul.f32 %v522, %v783
    %v924 = vmul.f32 %v522, %v787
    %v925 = vmul.f32 %v522, %v791
    %v926 = vmul.f32 %v522, %v795
    %v927 = vmul.f32 %v522, %v799
    %992 = vset.pattern.permute.xlu0 0
    %993 = vperm.xlu0 %992, %v864
    %v994 = vpop.permute.xlu0 %993
    %995 = vset.pattern.permute.xlu0 0
    %996 = vperm.xlu0 %995, %v865
    %v997 = vpop.permute.xlu0 %996
    %998 = vset.pattern.permute.xlu0 0
    %999 = vperm.xlu0 %998, %v866
    %v1000 = vpop.permute.xlu0 %999
    %1001 = vset.pattern.permute.xlu0 0
    %1002 = vperm.xlu0 %1001, %v867
    %v1003 = vpop.permute.xlu0 %1002
    %1004 = vset.pattern.permute.xlu0 0
    %1005 = vperm.xlu0 %1004, %v868
    %v1006 = vpop.permute.xlu0 %1005
    %1007 = vset.pattern.permute.xlu0 0
    %1008 = vperm.xlu0 %1007, %v869
    %v1009 = vpop.permute.xlu0 %1008
    %1010 = vset.pattern.permute.xlu0 0
    %1011 = vperm.xlu0 %1010, %v870
    %v1012 = vpop.permute.xlu0 %1011
    %1013 = vset.pattern.permute.xlu0 0
    %1014 = vperm.xlu0 %1013, %v871
    %v1015 = vpop.permute.xlu0 %1014
    %1016 = vset.pattern.permute.xlu0 0
    %1017 = vperm.xlu0 %1016, %v872
    %v1018 = vpop.permute.xlu0 %1017
    %1019 = vset.pattern.permute.xlu0 0
    %1020 = vperm.xlu0 %1019, %v873
    %v1021 = vpop.permute.xlu0 %1020
    %1022 = vset.pattern.permute.xlu0 0
    %1023 = vperm.xlu0 %1022, %v874
    %v1024 = vpop.permute.xlu0 %1023
    %1025 = vset.pattern.permute.xlu0 0
    %1026 = vperm.xlu0 %1025, %v875
    %v1027 = vpop.permute.xlu0 %1026
    %1028 = vset.pattern.permute.xlu0 0
    %1029 = vperm.xlu0 %1028, %v876
    %v1030 = vpop.permute.xlu0 %1029
    %1031 = vset.pattern.permute.xlu0 0
    %1032 = vperm.xlu0 %1031, %v877
    %v1033 = vpop.permute.xlu0 %1032
    %1034 = vset.pattern.permute.xlu0 0
    %1035 = vperm.xlu0 %1034, %v878
    %v1036 = vpop.permute.xlu0 %1035
    %1037 = vset.pattern.permute.xlu0 0
    %1038 = vperm.xlu0 %1037, %v879
    %v1039 = vpop.permute.xlu0 %1038
    %1040 = vset.pattern.permute.xlu0 0
    %1041 = vperm.xlu0 %1040, %v880
    %v1042 = vpop.permute.xlu0 %1041
    %1043 = vset.pattern.permute.xlu0 0
    %1044 = vperm.xlu0 %1043, %v881
    %v1045 = vpop.permute.xlu0 %1044
    %1046 = vset.pattern.permute.xlu0 0
    %1047 = vperm.xlu0 %1046, %v882
    %v1048 = vpop.permute.xlu0 %1047
    %1049 = vset.pattern.permute.xlu0 0
    %1050 = vperm.xlu0 %1049, %v883
    %v1051 = vpop.permute.xlu0 %1050
    %1052 = vset.pattern.permute.xlu0 0
    %1053 = vperm.xlu0 %1052, %v884
    %v1054 = vpop.permute.xlu0 %1053
    %1055 = vset.pattern.permute.xlu0 0
    %1056 = vperm.xlu0 %1055, %v885
    %v1057 = vpop.permute.xlu0 %1056
    %1058 = vset.pattern.permute.xlu0 0
    %1059 = vperm.xlu0 %1058, %v886
    %v1060 = vpop.permute.xlu0 %1059
    %1061 = vset.pattern.permute.xlu0 0
    %1062 = vperm.xlu0 %1061, %v887
    %v1063 = vpop.permute.xlu0 %1062
    %1064 = vset.pattern.permute.xlu0 0
    %1065 = vperm.xlu0 %1064, %v888
    %v1066 = vpop.permute.xlu0 %1065
    %1067 = vset.pattern.permute.xlu0 0
    %1068 = vperm.xlu0 %1067, %v889
    %v1069 = vpop.permute.xlu0 %1068
    %1070 = vset.pattern.permute.xlu0 0
    %1071 = vperm.xlu0 %1070, %v890
    %v1072 = vpop.permute.xlu0 %1071
    %1073 = vset.pattern.permute.xlu0 0
    %1074 = vperm.xlu0 %1073, %v891
    %v1075 = vpop.permute.xlu0 %1074
    %1076 = vset.pattern.permute.xlu0 0
    %1077 = vperm.xlu0 %1076, %v892
    %v1078 = vpop.permute.xlu0 %1077
    %1079 = vset.pattern.permute.xlu0 0
    %1080 = vperm.xlu0 %1079, %v893
    %v1081 = vpop.permute.xlu0 %1080
    %1082 = vset.pattern.permute.xlu0 0
    %1083 = vperm.xlu0 %1082, %v894
    %v1084 = vpop.permute.xlu0 %1083
    %1085 = vset.pattern.permute.xlu0 0
    %1086 = vperm.xlu0 %1085, %v895
    %v1087 = vpop.permute.xlu0 %1086
    %1088 = vset.pattern.permute.xlu0 0
    %1089 = vperm.xlu0 %1088, %v896
    %v1090 = vpop.permute.xlu0 %1089
    %1091 = vset.pattern.permute.xlu0 0
    %1092 = vperm.xlu0 %1091, %v897
    %v1093 = vpop.permute.xlu0 %1092
    %1094 = vset.pattern.permute.xlu0 0
    %1095 = vperm.xlu0 %1094, %v898
    %v1096 = vpop.permute.xlu0 %1095
    %1097 = vset.pattern.permute.xlu0 0
    %1098 = vperm.xlu0 %1097, %v899
    %v1099 = vpop.permute.xlu0 %1098
    %1100 = vset.pattern.permute.xlu0 0
    %1101 = vperm.xlu0 %1100, %v900
    %v1102 = vpop.permute.xlu0 %1101
    %1103 = vset.pattern.permute.xlu0 0
    %1104 = vperm.xlu0 %1103, %v901
    %v1105 = vpop.permute.xlu0 %1104
    %1106 = vset.pattern.permute.xlu0 0
    %1107 = vperm.xlu0 %1106, %v902
    %v1108 = vpop.permute.xlu0 %1107
    %1109 = vset.pattern.permute.xlu0 0
    %1110 = vperm.xlu0 %1109, %v903
    %v1111 = vpop.permute.xlu0 %1110
    %1112 = vset.pattern.permute.xlu0 0
    %1113 = vperm.xlu0 %1112, %v904
    %v1114 = vpop.permute.xlu0 %1113
    %1115 = vset.pattern.permute.xlu0 0
    %1116 = vperm.xlu0 %1115, %v905
    %v1117 = vpop.permute.xlu0 %1116
    %1118 = vset.pattern.permute.xlu0 0
    %1119 = vperm.xlu0 %1118, %v906
    %v1120 = vpop.permute.xlu0 %1119
    %1121 = vset.pattern.permute.xlu0 0
    %1122 = vperm.xlu0 %1121, %v907
    %v1123 = vpop.permute.xlu0 %1122
    %1124 = vset.pattern.permute.xlu0 0
    %1125 = vperm.xlu0 %1124, %v908
    %v1126 = vpop.permute.xlu0 %1125
    %1127 = vset.pattern.permute.xlu0 0
    %1128 = vperm.xlu0 %1127, %v909
    %v1129 = vpop.permute.xlu0 %1128
    %1130 = vset.pattern.permute.xlu0 0
    %1131 = vperm.xlu0 %1130, %v910
    %v1132 = vpop.permute.xlu0 %1131
    %1133 = vset.pattern.permute.xlu0 0
    %1134 = vperm.xlu0 %1133, %v911
    %v1135 = vpop.permute.xlu0 %1134
    %1136 = vset.pattern.permute.xlu0 0
    %1137 = vperm.xlu0 %1136, %v912
    %v1138 = vpop.permute.xlu0 %1137
    %1139 = vset.pattern.permute.xlu0 0
    %1140 = vperm.xlu0 %1139, %v913
    %v1141 = vpop.permute.xlu0 %1140
    %1142 = vset.pattern.permute.xlu0 0
    %1143 = vperm.xlu0 %1142, %v914
    %v1144 = vpop.permute.xlu0 %1143
    %1145 = vset.pattern.permute.xlu0 0
    %1146 = vperm.xlu0 %1145, %v915
    %v1147 = vpop.permute.xlu0 %1146
    %1148 = vset.pattern.permute.xlu0 0
    %1149 = vperm.xlu0 %1148, %v916
    %v1150 = vpop.permute.xlu0 %1149
    %1151 = vset.pattern.permute.xlu0 0
    %1152 = vperm.xlu0 %1151, %v917
    %v1153 = vpop.permute.xlu0 %1152
    %1154 = vset.pattern.permute.xlu0 0
    %1155 = vperm.xlu0 %1154, %v918
    %v1156 = vpop.permute.xlu0 %1155
    %1157 = vset.pattern.permute.xlu0 0
    %1158 = vperm.xlu0 %1157, %v919
    %v1159 = vpop.permute.xlu0 %1158
    %1160 = vset.pattern.permute.xlu0 0
    %1161 = vperm.xlu0 %1160, %v920
    %v1162 = vpop.permute.xlu0 %1161
    %1163 = vset.pattern.permute.xlu0 0
    %1164 = vperm.xlu0 %1163, %v921
    %v1165 = vpop.permute.xlu0 %1164
    %1166 = vset.pattern.permute.xlu0 0
    %1167 = vperm.xlu0 %1166, %v922
    %v1168 = vpop.permute.xlu0 %1167
    %1169 = vset.pattern.permute.xlu0 0
    %1170 = vperm.xlu0 %1169, %v923
    %v1171 = vpop.permute.xlu0 %1170
    %1172 = vset.pattern.permute.xlu0 0
    %1173 = vperm.xlu0 %1172, %v924
    %v1174 = vpop.permute.xlu0 %1173
    %1175 = vset.pattern.permute.xlu0 0
    %1176 = vperm.xlu0 %1175, %v925
    %v1177 = vpop.permute.xlu0 %1176
    %1178 = vset.pattern.permute.xlu0 0
    %1179 = vperm.xlu0 %1178, %v926
    %v1180 = vpop.permute.xlu0 %1179
    %1181 = vset.pattern.permute.xlu0 0
    %1182 = vperm.xlu0 %1181, %v927
    %v1183 = vpop.permute.xlu0 %1182
    %v1184 = vlaneseq
    %v1185 = vshrl.u32 %v1184, 7
    %v1186 = vsub.s32 %v302, %v1185
    %v1187 = vrot.slane %v994, %v1186
    %v1188 = vlaneseq
    %v1189 = vshrl.u32 %v1188, 7
    %v1190 = vsub.s32 %v307, %v1189
    %v1191 = vrot.slane %v997, %v1190
    %v1192 = vsel %vm312, %v1191, %v1187
    %v1193 = vadd.s32 %v302, 4294967280
    %v1194 = vlaneseq
    %v1195 = vshrl.u32 %v1194, 7
    %v1196 = vsub.s32 %v1193, %v1195
    %v1197 = vrot.slane %v1000, %v1196
    %vm1198 = vcmask 195712
    %v1199 = vsel %vm1198, %v1197, %v1192
    %v1200 = vadd.s32 %v302, 4294967272
    %v1201 = vlaneseq
    %v1202 = vshrl.u32 %v1201, 7
    %v1203 = vsub.s32 %v1200, %v1202
    %v1204 = vrot.slane %v1003, %v1203
    %vm1205 = vcmask 261312
    %v1206 = vsel %vm1205, %v1204, %v1199
    %v1207 = vadd.s32 %v302, 4294967264
    %v1208 = vlaneseq
    %v1209 = vshrl.u32 %v1208, 7
    %v1210 = vsub.s32 %v1207, %v1209
    %v1211 = vrot.slane %v1006, %v1210
    %vm1212 = vcmask 326912
    %v1213 = vsel %vm1212, %v1211, %v1206
    %v1214 = vadd.s32 %v302, 4294967256
    %v1215 = vlaneseq
    %v1216 = vshrl.u32 %v1215, 7
    %v1217 = vsub.s32 %v1214, %v1216
    %v1218 = vrot.slane %v1009, %v1217
    %vm1219 = vcmask 392512
    %v1220 = vsel %vm1219, %v1218, %v1213
    %v1221 = vadd.s32 %v302, 4294967248
    %v1222 = vlaneseq
    %v1223 = vshrl.u32 %v1222, 7
    %v1224 = vsub.s32 %v1221, %v1223
    %v1225 = vrot.slane %v1012, %v1224
    %vm1226 = vcmask 458112
    %v1227 = vsel %vm1226, %v1225, %v1220
    %v1228 = vadd.s32 %v302, 4294967240
    %v1229 = vlaneseq
    %v1230 = vshrl.u32 %v1229, 7
    %v1231 = vsub.s32 %v1228, %v1230
    %v1232 = vrot.slane %v1015, %v1231
    %vm1233 = vcmask 523712
    %v1234 = vsel %vm1233, %v1232, %v1227
    %v1235 = vadd.s32 %v302, 4294967232
    %v1236 = vlaneseq
    %v1237 = vshrl.u32 %v1236, 7
    %v1238 = vsub.s32 %v1235, %v1237
    %v1239 = vrot.slane %v1018, %v1238
    %vm1240 = vcmask 589312
    %v1241 = vsel %vm1240, %v1239, %v1234
    %v1242 = vadd.s32 %v302, 4294967224
    %v1243 = vlaneseq
    %v1244 = vshrl.u32 %v1243, 7
    %v1245 = vsub.s32 %v1242, %v1244
    %v1246 = vrot.slane %v1021, %v1245
    %vm1247 = vcmask 654912
    %v1248 = vsel %vm1247, %v1246, %v1241
    %v1249 = vadd.s32 %v302, 4294967216
    %v1250 = vlaneseq
    %v1251 = vshrl.u32 %v1250, 7
    %v1252 = vsub.s32 %v1249, %v1251
    %v1253 = vrot.slane %v1024, %v1252
    %vm1254 = vcmask 720512
    %v1255 = vsel %vm1254, %v1253, %v1248
    %v1256 = vadd.s32 %v302, 4294967208
    %v1257 = vlaneseq
    %v1258 = vshrl.u32 %v1257, 7
    %v1259 = vsub.s32 %v1256, %v1258
    %v1260 = vrot.slane %v1027, %v1259
    %vm1261 = vcmask 786112
    %v1262 = vsel %vm1261, %v1260, %v1255
    %v1263 = vadd.s32 %v302, 4294967200
    %v1264 = vlaneseq
    %v1265 = vshrl.u32 %v1264, 7
    %v1266 = vsub.s32 %v1263, %v1265
    %v1267 = vrot.slane %v1030, %v1266
    %vm1268 = vcmask 851712
    %v1269 = vsel %vm1268, %v1267, %v1262
    %v1270 = vadd.s32 %v302, 4294967192
    %v1271 = vlaneseq
    %v1272 = vshrl.u32 %v1271, 7
    %v1273 = vsub.s32 %v1270, %v1272
    %v1274 = vrot.slane %v1033, %v1273
    %vm1275 = vcmask 917312
    %v1276 = vsel %vm1275, %v1274, %v1269
    %v1277 = vadd.s32 %v302, 4294967184
    %v1278 = vlaneseq
    %v1279 = vshrl.u32 %v1278, 7
    %v1280 = vsub.s32 %v1277, %v1279
    %v1281 = vrot.slane %v1036, %v1280
    %vm1282 = vcmask 982912
    %v1283 = vsel %vm1282, %v1281, %v1276
    %v1284 = vadd.s32 %v302, 4294967176
    %v1285 = vlaneseq
    %v1286 = vshrl.u32 %v1285, 7
    %v1287 = vsub.s32 %v1284, %v1286
    %v1288 = vrot.slane %v1039, %v1287
    %vm1289 = vcmask 1048512
    %v1290 = vsel %vm1289, %v1288, %v1283
    %v1291 = vlaneseq
    %v1292 = vshrl.u32 %v1291, 7
    %v1293 = vsub.s32 %v302, %v1292
    %v1294 = vrot.slane %v1042, %v1293
    %v1295 = vlaneseq
    %v1296 = vshrl.u32 %v1295, 7
    %v1297 = vsub.s32 %v307, %v1296
    %v1298 = vrot.slane %v1045, %v1297
    %v1299 = vsel %vm312, %v1298, %v1294
    %v1300 = vlaneseq
    %v1301 = vshrl.u32 %v1300, 7
    %v1302 = vsub.s32 %v1193, %v1301
    %v1303 = vrot.slane %v1048, %v1302
    %v1304 = vsel %vm1198, %v1303, %v1299
    %v1305 = vlaneseq
    %v1306 = vshrl.u32 %v1305, 7
    %v1307 = vsub.s32 %v1200, %v1306
    %v1308 = vrot.slane %v1051, %v1307
    %v1309 = vsel %vm1205, %v1308, %v1304
    %v1310 = vlaneseq
    %v1311 = vshrl.u32 %v1310, 7
    %v1312 = vsub.s32 %v1207, %v1311
    %v1313 = vrot.slane %v1054, %v1312
    %v1314 = vsel %vm1212, %v1313, %v1309
    %v1315 = vlaneseq
    %v1316 = vshrl.u32 %v1315, 7
    %v1317 = vsub.s32 %v1214, %v1316
    %v1318 = vrot.slane %v1057, %v1317
    %v1319 = vsel %vm1219, %v1318, %v1314
    %v1320 = vlaneseq
    %v1321 = vshrl.u32 %v1320, 7
    %v1322 = vsub.s32 %v1221, %v1321
    %v1323 = vrot.slane %v1060, %v1322
    %v1324 = vsel %vm1226, %v1323, %v1319
    %v1325 = vlaneseq
    %v1326 = vshrl.u32 %v1325, 7
    %v1327 = vsub.s32 %v1228, %v1326
    %v1328 = vrot.slane %v1063, %v1327
    %v1329 = vsel %vm1233, %v1328, %v1324
    %v1330 = vlaneseq
    %v1331 = vshrl.u32 %v1330, 7
    %v1332 = vsub.s32 %v1235, %v1331
    %v1333 = vrot.slane %v1066, %v1332
    %v1334 = vsel %vm1240, %v1333, %v1329
    %v1335 = vlaneseq
    %v1336 = vshrl.u32 %v1335, 7
    %v1337 = vsub.s32 %v1242, %v1336
    %v1338 = vrot.slane %v1069, %v1337
    %v1339 = vsel %vm1247, %v1338, %v1334
    %v1340 = vlaneseq
    %v1341 = vshrl.u32 %v1340, 7
    %v1342 = vsub.s32 %v1249, %v1341
    %v1343 = vrot.slane %v1072, %v1342
    %v1344 = vsel %vm1254, %v1343, %v1339
    %v1345 = vlaneseq
    %v1346 = vshrl.u32 %v1345, 7
    %v1347 = vsub.s32 %v1256, %v1346
    %v1348 = vrot.slane %v1075, %v1347
    %v1349 = vsel %vm1261, %v1348, %v1344
    %v1350 = vlaneseq
    %v1351 = vshrl.u32 %v1350, 7
    %v1352 = vsub.s32 %v1263, %v1351
    %v1353 = vrot.slane %v1078, %v1352
    %v1354 = vsel %vm1268, %v1353, %v1349
    %v1355 = vlaneseq
    %v1356 = vshrl.u32 %v1355, 7
    %v1357 = vsub.s32 %v1270, %v1356
    %v1358 = vrot.slane %v1081, %v1357
    %v1359 = vsel %vm1275, %v1358, %v1354
    %v1360 = vlaneseq
    %v1361 = vshrl.u32 %v1360, 7
    %v1362 = vsub.s32 %v1277, %v1361
    %v1363 = vrot.slane %v1084, %v1362
    %v1364 = vsel %vm1282, %v1363, %v1359
    %v1365 = vlaneseq
    %v1366 = vshrl.u32 %v1365, 7
    %v1367 = vsub.s32 %v1284, %v1366
    %v1368 = vrot.slane %v1087, %v1367
    %v1369 = vsel %vm1289, %v1368, %v1364
    %v1370 = vlaneseq
    %v1371 = vshrl.u32 %v1370, 7
    %v1372 = vsub.s32 %v302, %v1371
    %v1373 = vrot.slane %v1090, %v1372
    %v1374 = vlaneseq
    %v1375 = vshrl.u32 %v1374, 7
    %v1376 = vsub.s32 %v307, %v1375
    %v1377 = vrot.slane %v1093, %v1376
    %v1378 = vsel %vm312, %v1377, %v1373
    %v1379 = vlaneseq
    %v1380 = vshrl.u32 %v1379, 7
    %v1381 = vsub.s32 %v1193, %v1380
    %v1382 = vrot.slane %v1096, %v1381
    %v1383 = vsel %vm1198, %v1382, %v1378
    %v1384 = vlaneseq
    %v1385 = vshrl.u32 %v1384, 7
    %v1386 = vsub.s32 %v1200, %v1385
    %v1387 = vrot.slane %v1099, %v1386
    %v1388 = vsel %vm1205, %v1387, %v1383
    %v1389 = vlaneseq
    %v1390 = vshrl.u32 %v1389, 7
    %v1391 = vsub.s32 %v1207, %v1390
    %v1392 = vrot.slane %v1102, %v1391
    %v1393 = vsel %vm1212, %v1392, %v1388
    %v1394 = vlaneseq
    %v1395 = vshrl.u32 %v1394, 7
    %v1396 = vsub.s32 %v1214, %v1395
    %v1397 = vrot.slane %v1105, %v1396
    %v1398 = vsel %vm1219, %v1397, %v1393
    %v1399 = vlaneseq
    %v1400 = vshrl.u32 %v1399, 7
    %v1401 = vsub.s32 %v1221, %v1400
    %v1402 = vrot.slane %v1108, %v1401
    %v1403 = vsel %vm1226, %v1402, %v1398
    %v1404 = vlaneseq
    %v1405 = vshrl.u32 %v1404, 7
    %v1406 = vsub.s32 %v1228, %v1405
    %v1407 = vrot.slane %v1111, %v1406
    %v1408 = vsel %vm1233, %v1407, %v1403
    %v1409 = vlaneseq
    %v1410 = vshrl.u32 %v1409, 7
    %v1411 = vsub.s32 %v1235, %v1410
    %v1412 = vrot.slane %v1114, %v1411
    %v1413 = vsel %vm1240, %v1412, %v1408
    %v1414 = vlaneseq
    %v1415 = vshrl.u32 %v1414, 7
    %v1416 = vsub.s32 %v1242, %v1415
    %v1417 = vrot.slane %v1117, %v1416
    %v1418 = vsel %vm1247, %v1417, %v1413
    %v1419 = vlaneseq
    %v1420 = vshrl.u32 %v1419, 7
    %v1421 = vsub.s32 %v1249, %v1420
    %v1422 = vrot.slane %v1120, %v1421
    %v1423 = vsel %vm1254, %v1422, %v1418
    %v1424 = vlaneseq
    %v1425 = vshrl.u32 %v1424, 7
    %v1426 = vsub.s32 %v1256, %v1425
    %v1427 = vrot.slane %v1123, %v1426
    %v1428 = vsel %vm1261, %v1427, %v1423
    %v1429 = vlaneseq
    %v1430 = vshrl.u32 %v1429, 7
    %v1431 = vsub.s32 %v1263, %v1430
    %v1432 = vrot.slane %v1126, %v1431
    %v1433 = vsel %vm1268, %v1432, %v1428
    %v1434 = vlaneseq
    %v1435 = vshrl.u32 %v1434, 7
    %v1436 = vsub.s32 %v1270, %v1435
    %v1437 = vrot.slane %v1129, %v1436
    %v1438 = vsel %vm1275, %v1437, %v1433
    %v1439 = vlaneseq
    %v1440 = vshrl.u32 %v1439, 7
    %v1441 = vsub.s32 %v1277, %v1440
    %v1442 = vrot.slane %v1132, %v1441
    %v1443 = vsel %vm1282, %v1442, %v1438
    %v1444 = vlaneseq
    %v1445 = vshrl.u32 %v1444, 7
    %v1446 = vsub.s32 %v1284, %v1445
    %v1447 = vrot.slane %v1135, %v1446
    %v1448 = vsel %vm1289, %v1447, %v1443
    %v1449 = vlaneseq
    %v1450 = vshrl.u32 %v1449, 7
    %v1451 = vsub.s32 %v302, %v1450
    %v1452 = vrot.slane %v1138, %v1451
    %v1453 = vlaneseq
    %v1454 = vshrl.u32 %v1453, 7
    %v1455 = vsub.s32 %v307, %v1454
    %v1456 = vrot.slane %v1141, %v1455
    %v1457 = vsel %vm312, %v1456, %v1452
    %v1458 = vlaneseq
    %v1459 = vshrl.u32 %v1458, 7
    %v1460 = vsub.s32 %v1193, %v1459
    %v1461 = vrot.slane %v1144, %v1460
    %v1462 = vsel %vm1198, %v1461, %v1457
    %v1463 = vlaneseq
    %v1464 = vshrl.u32 %v1463, 7
    %v1465 = vsub.s32 %v1200, %v1464
    %v1466 = vrot.slane %v1147, %v1465
    %v1467 = vsel %vm1205, %v1466, %v1462
    %v1468 = vlaneseq
    %v1469 = vshrl.u32 %v1468, 7
    %v1470 = vsub.s32 %v1207, %v1469
    %v1471 = vrot.slane %v1150, %v1470
    %v1472 = vsel %vm1212, %v1471, %v1467
    %v1473 = vlaneseq
    %v1474 = vshrl.u32 %v1473, 7
    %v1475 = vsub.s32 %v1214, %v1474
    %v1476 = vrot.slane %v1153, %v1475
    %v1477 = vsel %vm1219, %v1476, %v1472
    %v1478 = vlaneseq
    %v1479 = vshrl.u32 %v1478, 7
    %v1480 = vsub.s32 %v1221, %v1479
    %v1481 = vrot.slane %v1156, %v1480
    %v1482 = vsel %vm1226, %v1481, %v1477
    %v1483 = vlaneseq
    %v1484 = vshrl.u32 %v1483, 7
    %v1485 = vsub.s32 %v1228, %v1484
    %v1486 = vrot.slane %v1159, %v1485
    %v1487 = vsel %vm1233, %v1486, %v1482
    %v1488 = vlaneseq
    %v1489 = vshrl.u32 %v1488, 7
    %v1490 = vsub.s32 %v1235, %v1489
    %v1491 = vrot.slane %v1162, %v1490
    %v1492 = vsel %vm1240, %v1491, %v1487
    %v1493 = vlaneseq
    %v1494 = vshrl.u32 %v1493, 7
    %v1495 = vsub.s32 %v1242, %v1494
    %v1496 = vrot.slane %v1165, %v1495
    %v1497 = vsel %vm1247, %v1496, %v1492
    %v1498 = vlaneseq
    %v1499 = vshrl.u32 %v1498, 7
    %v1500 = vsub.s32 %v1249, %v1499
    %v1501 = vrot.slane %v1168, %v1500
    %v1502 = vsel %vm1254, %v1501, %v1497
    %v1503 = vlaneseq
    %v1504 = vshrl.u32 %v1503, 7
    %v1505 = vsub.s32 %v1256, %v1504
    %v1506 = vrot.slane %v1171, %v1505
    %v1507 = vsel %vm1261, %v1506, %v1502
    %v1508 = vlaneseq
    %v1509 = vshrl.u32 %v1508, 7
    %v1510 = vsub.s32 %v1263, %v1509
    %v1511 = vrot.slane %v1174, %v1510
    %v1512 = vsel %vm1268, %v1511, %v1507
    %v1513 = vlaneseq
    %v1514 = vshrl.u32 %v1513, 7
    %v1515 = vsub.s32 %v1270, %v1514
    %v1516 = vrot.slane %v1177, %v1515
    %v1517 = vsel %vm1275, %v1516, %v1512
    %v1518 = vlaneseq
    %v1519 = vshrl.u32 %v1518, 7
    %v1520 = vsub.s32 %v1277, %v1519
    %v1521 = vrot.slane %v1180, %v1520
    %v1522 = vsel %vm1282, %v1521, %v1517
    %v1523 = vlaneseq
    %v1524 = vshrl.u32 %v1523, 7
    %v1525 = vsub.s32 %v1284, %v1524
    %v1526 = vrot.slane %v1183, %v1525
    %v1527 = vsel %vm1289, %v1526, %v1522
    %v1532 = vadd.f32 %v492, %v1290
    %v1533 = vadd.f32 %v499, %v1369
    %v1534 = vadd.f32 %v506, %v1448
    %v1535 = vadd.f32 %v513, %v1527
    %v1540 = vcombine.low %v1532, %v1533
    %v1542 = vunpack.c.l.s4 1983009808
    %v1543 = vunpack.c.0.s8 %v1542
    %v1544 = vlaneseq
    %v1545 = vshrl.u32 %v1544, 7
    %v1546 = vsub.s32 %v1543, %v1545
    %v1547 = vrot.slane %v1540, %v1546
    %v1548 = vcombine.low %v1534, %v1535
    %v1550 = vunpack.c.l.s4 1983009808
    %v1551 = vunpack.c.0.s8 %v1550
    %v1552 = vlaneseq
    %v1553 = vshrl.u32 %v1552, 7
    %v1554 = vsub.s32 %v1551, %v1553
    %v1555 = vrot.slane %v1548, %v1554
    %vm1556 = vcmask 1044484
    %v1557 = vsel %vm1556, %v1547, %v1547
    %vm1558 = vcmask 1046534
    %v1559 = vsel %vm1558, %v1547, %v1557
    %v1560 = vrot.slane %v1555, 7
    %v1561 = vsel %vm323, %v1560, %v1559
    %vm1562 = vcmask 1043459
    %v1563 = vsel %vm1562, %v1560, %v1561
    %vm1564 = vcmask 1045509
    %v1565 = vsel %vm1564, %v1560, %v1563
    %vm1566 = vcmask 1047559
    %v1567 = vsel %vm1566, %v1560, %v1565
    %1569 = vst [vmem:[#allocation11] sm:$0xf] %v1567
    // Predicated region
    $region50: #{tpu_custom_call.1} parent=1 // pred_check
      _
    $region51: #{tpu_custom_call.1} parent=1 // pred_check_branch
      %1571 = sbr.rel (0) target = $region53
    $region52: #{tpu_custom_call.1} parent=1 // pred_region
      %s1573 = ssub.s32 64, 64
      %1574 = vsyncadd [#allocation4], %s1573
      %s1576 = sshll.u32 [#allocation11], 4
      %s1577 = int_to_ptr.vmem [resolvable:$true] %s1576
      %1579 = dma.vmem_to_hbm [thread:$0]  %s1577, 64, %s7, [#allocation4]
    $region53: #{tpu_custom_call.1} parent=1 // pred_fallthru
      _
    // Predicated region
    $region54: #{tpu_custom_call.1} parent=1 // pred_check
      _
    $region55: #{tpu_custom_call.1} parent=1 // pred_check_branch
      %1581 = sbr.rel (0) target = $region57
    $region56: #{tpu_custom_call.1} parent=1 // pred_region
      %1582 = dma.done [#allocation4], 64
    $region57: #{tpu_custom_call.1} parent=1 // pred_fallthru
      _
    %1583 = vsyncpa [#allocation3], 1
    %1584 = vsyncpa [#allocation6], 1
    %1585 = vsyncpa [#allocation9], 1
    %1586 = vsyncpa [#allocation4], 1

</llo_original>
